<compile_context>
chip_gen: v5e
topology: v5e:2x2
jax: 0.10.0
libtpu: 0.0.40
codegen_flags: <defaults>
</compile_context>

<pallas_src>
import jax
import jax.numpy as jnp
from jax import lax
from jax.experimental import pallas as pl
from jax.experimental.pallas import tpu as pltpu

_INV_SQRT2 = 0.7071067811865475244


def _gelu_exact(h):
    # Exact GELU (torch.nn.GELU default), f32 on VPU/EUP.
    return 0.5 * h * (1.0 + lax.erf(h * _INV_SQRT2))


def _mlp_kernel_direct(x_ref, w1_ref, b1_ref, w2_ref, b2_ref, o_ref):
    """f32 output path: accumulate fc2 partial sums directly into o_ref
    (which is resident across the H axis), no scratch, no zero-fill."""
    j = pl.program_id(1)

    h = jnp.dot(x_ref[...], w1_ref[...], preferred_element_type=jnp.float32)
    h = _gelu_exact(h + b1_ref[...].astype(jnp.float32))
    partial = jnp.dot(h.astype(w2_ref.dtype), w2_ref[...],
                      preferred_element_type=jnp.float32)

    @pl.when(j == 0)
    def _():
        o_ref[...] = partial + b2_ref[...].astype(jnp.float32)

    @pl.when(j > 0)
    def _():
        o_ref[...] += partial


def _mlp_kernel_scratch(x_ref, w1_ref, b1_ref, w2_ref, b2_ref, o_ref, acc_ref):
    """Narrow-dtype output path: accumulate in an f32 VMEM scratch (first H
    step writes, later steps add), bias + cast + store on the last step."""
    j = pl.program_id(1)

    h = jnp.dot(x_ref[...], w1_ref[...], preferred_element_type=jnp.float32)
    h = _gelu_exact(h + b1_ref[...].astype(jnp.float32))
    partial = jnp.dot(h.astype(w2_ref.dtype), w2_ref[...],
                      preferred_element_type=jnp.float32)

    @pl.when(j == 0)
    def _():
        acc_ref[...] = partial

    @pl.when(j > 0)
    def _():
        acc_ref[...] += partial

    @pl.when(j == pl.num_programs(1) - 1)
    def _():
        o_ref[...] = (acc_ref[...] + b2_ref[...].astype(jnp.float32)
                      ).astype(o_ref.dtype)


def _round_up(v, m):
    return (v + m - 1) // m * m


def _pad_to(a, shape):
    pads = [(0, t - s) for s, t in zip(a.shape, shape)]
    if all(p == (0, 0) for p in pads):
        return a
    return jnp.pad(a, pads)


def _vmem_capacity_bytes():
    """Physical VMEM of this generation (128 MiB v5e/v6e, 64 MiB/TC v7x)."""
    try:
        info = pltpu.get_tpu_info()
        cap = int(getattr(info, "vmem_capacity_bytes", 0) or 0)
        if cap > 0:
            return cap
    except Exception:
        pass
    return 64 * 1024 * 1024  # safe floor (v7x per-TC VMEM)


def _working_set_bytes(tm, th, Dp, itemsize, use_scratch):
    # Double-buffered input tiles (BlockSpec pipelining), double-buffered
    # output block, optional f32 accumulator scratch, and the in-kernel
    # (tm, th) intermediate (f32 GELU slab + its cast for the second matmul).
    inputs = 2 * itemsize * (tm * Dp + Dp * th + th + th * Dp + Dp)
    output = 2 * itemsize * tm * Dp
    scratch = 4 * tm * Dp if use_scratch else 0
    temps = (4 + itemsize) * tm * th
    return inputs + output + scratch + temps


def _choose_tiles(M, Dp, Hp, itemsize, use_scratch, vmem_cap):
    # Sublane multiple for dense vreg packing: 8 (f32), 16 (bf16), 32 (int8).
    sub = max(8, 32 // itemsize)
    tm_cap = _round_up(M, sub)

    # Hidden-chunk candidates: divisors of Hp (Hp is a multiple of 128), so no
    # all-zero padded hidden columns are ever multiplied; target <= 512.
    th_cands = [t for t in range(min(512, Hp), 127, -128) if Hp % t == 0]
    if not th_cands:
        th_cands = [Hp]

    # Row-tile candidates: tm controls how many times W1/W2 are re-streamed
    # from HBM, so prefer the largest tm that fits the VMEM budget.
    ladder = [1024, 896, 768, 640, 512, 448, 384, 320, 256, 192, 128,
              96, 64, 48, 32, 16, 8]
    tm_cands = sorted({min(c, tm_cap) for c in ladder if c % sub == 0}
                      | {min(tm_cap, 1024)}, reverse=True)
    tm_cands = [t for t in tm_cands if t >= sub]

    budget = int(0.75 * vmem_cap)
    for tm in tm_cands:
        for th in th_cands:
            if _working_set_bytes(tm, th, Dp, itemsize, use_scratch) <= budget:
                return tm, th
    return tm_cands[-1], th_cands[-1]


def domain_common_forward(x, w1, b1, w2, b2):
    """y = GELU(x @ w1 + b1) @ w2 + b2  (exact erf GELU).

    x: (..., D).  w1: (D, H), b1: (H,), w2: (H, D), b2: (D,).
    """
    orig_shape = x.shape
    D = orig_shape[-1]
    H = w1.shape[1]
    x2d = x.reshape(-1, D)
    M = x2d.shape[0]

    itemsize = jnp.dtype(x.dtype).itemsize
    use_scratch = jnp.dtype(x.dtype) != jnp.float32

    # Lane-dense padding: D and H to multiples of 128 only; M to the row tile.
    # Padding contributes exactly zero (zero weight rows/cols, zero bias,
    # GELU(0)=0) and is sliced off at the end.
    Dp = _round_up(D, 128)
    Hp = _round_up(H, 128)

    vmem_cap = _vmem_capacity_bytes()
    tm, th = _choose_tiles(M, Dp, Hp, itemsize, use_scratch, vmem_cap)
    Mp = _round_up(M, tm)
    m_tiles = Mp // tm

    xp = _pad_to(x2d, (Mp, Dp))
    w1p = _pad_to(w1, (Dp, Hp))
    b1p = _pad_to(b1.reshape(1, H), (1, Hp))
    w2p = _pad_to(w2, (Hp, Dp))
    b2p = _pad_to(b2.reshape(1, D), (1, Dp))

    ws = _working_set_bytes(tm, th, Dp, itemsize, use_scratch)
    vmem_limit = int(min(0.9 * vmem_cap, max(1.5 * ws, 32 * 1024 * 1024)))

    # Honest HBM-traffic estimate: x read once and output written once, but
    # the weights/bias1 are re-streamed once per row tile (m_tiles passes).
    cost = pl.CostEstimate(
        flops=4 * M * D * H,
        transcendentals=M * H,
        bytes_accessed=int(itemsize * (2 * Mp * Dp + Dp
                                       + m_tiles * (2 * Dp * Hp + Hp))),
    )

    kernel = _mlp_kernel_scratch if use_scratch else _mlp_kernel_direct
    scratch_shapes = ([pltpu.VMEM((tm, Dp), jnp.float32)]
                      if use_scratch else [])

    out = pl.pallas_call(
        kernel,
        out_shape=jax.ShapeDtypeStruct((Mp, Dp), x.dtype),
        grid_spec=pltpu.PrefetchScalarGridSpec(
            num_scalar_prefetch=0,
            grid=(m_tiles, Hp // th),                # reduction (H) axis last
            in_specs=[
                pl.BlockSpec((tm, Dp), lambda i, j: (i, 0)),   # x rows (resident over j)
                pl.BlockSpec((Dp, th), lambda i, j: (0, j)),   # W1 H-chunk
                pl.BlockSpec((1, th), lambda i, j: (0, j)),    # b1 H-chunk
                pl.BlockSpec((th, Dp), lambda i, j: (j, 0)),   # W2 H-chunk
                pl.BlockSpec((1, Dp), lambda i, j: (0, 0)),    # b2
            ],
            out_specs=pl.BlockSpec((tm, Dp), lambda i, j: (i, 0)),
            scratch_shapes=scratch_shapes,
        ),
        compiler_params=pltpu.CompilerParams(
            dimension_semantics=("parallel", "arbitrary"),
            vmem_limit_bytes=vmem_limit),
        cost_estimate=cost,
    )(xp, w1p, b1p, w2p, b2p)

    return out[:M, :D].reshape(orig_shape)


def init_domain_common_params(key, D_features, mlp_ratio=2.0, dtype=jnp.float32):
    """Deterministic synthetic init (shapes match nn.Linear of the module)."""
    H = int(D_features * mlp_ratio)
    k1, k2, k3, k4 = jax.random.split(key, 4)
    # PyTorch Linear stores weight as (out, in); we store the transposed (in, out).
    w1 = jax.random.normal(k1, (D_features, H), dtype) * 0.02
    b1 = jax.random.normal(k2, (H,), dtype) * 0.02
    w2 = jax.random.normal(k3, (H, D_features), dtype) * 0.02
    b2 = jax.random.normal(k4, (D_features,), dtype) * 0.02
    return w1, b1, w2, b2


if __name__ == "__main__":
    key = jax.random.PRNGKey(0)
    kx, kp = jax.random.split(key)

    B, N, D = 2, 8, 32          # batch, tokens, D_features
    mlp_ratio = 2.0
    H = int(D * mlp_ratio)

    x = jax.random.normal(kx, (B, N, D), jnp.float32)
    w1, b1, w2, b2 = init_domain_common_params(kp, D, mlp_ratio)

    # Pure-JAX reference (exact GELU, matches torch.nn.GELU()).
    def ref(xv):
        h = xv.reshape(-1, D) @ w1 + b1
        h = 0.5 * h * (1.0 + lax.erf(h / jnp.sqrt(2.0)))
        return (h @ w2 + b2).reshape(xv.shape)

    # f32 path (direct accumulation into the output block).
    y = jax.block_until_ready(domain_common_forward(x, w1, b1, w2, b2))
    ref_y = ref(x)
    assert y.shape == x.shape
    assert jnp.allclose(y, ref_y, atol=1e-5, rtol=1e-5), float(
        jnp.max(jnp.abs(y - ref_y)))

    # bf16 path (f32 scratch accumulator), loose tolerance vs f32 reference.
    xb = x.astype(jnp.bfloat16)
    yb = jax.block_until_ready(domain_common_forward(
        xb, w1.astype(jnp.bfloat16), b1.astype(jnp.bfloat16),
        w2.astype(jnp.bfloat16), b2.astype(jnp.bfloat16)))
    assert yb.shape == x.shape
    assert jnp.allclose(yb.astype(jnp.float32), ref_y, atol=1e-2), float(
        jnp.max(jnp.abs(yb.astype(jnp.float32) - ref_y)))

    print("KERNEL_OK")
</pallas_src>

<mosaic_0001>
module attributes {stable_mosaic.version = 11 : i64} {
  func.func @_mlp_kernel_direct(%arg0: i32, %arg1: i32, %arg2: memref<16x128xf32, #tpu.memory_space<vmem>>, %arg3: memref<128x128xf32, #tpu.memory_space<vmem>>, %arg4: memref<1x128xf32, #tpu.memory_space<vmem>>, %arg5: memref<128x128xf32, #tpu.memory_space<vmem>>, %arg6: memref<1x128xf32, #tpu.memory_space<vmem>>, %arg7: memref<16x128xf32, #tpu.memory_space<vmem>>) attributes {dimension_semantics = [#tpu.dimension_semantics<parallel>, #tpu.dimension_semantics<arbitrary>], iteration_bounds = array<i64: 1, 1>, scalar_prefetch = 0 : i64, scratch_operands = 0 : i64, tpu.core_type = #tpu.core_type<tc>, window_params = [{transform_indices = @transform_0, window_bounds = array<i64: 16, 128>}, {transform_indices = @transform_1, window_bounds = array<i64: 128, 128>}, {transform_indices = @transform_2, window_bounds = array<i64: 1, 128>}, {transform_indices = @transform_3, window_bounds = array<i64: 128, 128>}, {pipeline_mode = #tpu.pipeline_mode<synchronous>, transform_indices = @transform_4, window_bounds = array<i64: 1, 128>}, {transform_indices = @transform_5, window_bounds = array<i64: 16, 128>}]} {
    %c0 = arith.constant 0 : index
    %c0_0 = arith.constant 0 : index
    %0 = vector.load %arg2[%c0, %c0_0] : memref<16x128xf32, #tpu.memory_space<vmem>>, vector<16x128xf32>
    %c0_1 = arith.constant 0 : index
    %c0_2 = arith.constant 0 : index
    %1 = vector.load %arg3[%c0_1, %c0_2] : memref<128x128xf32, #tpu.memory_space<vmem>>, vector<128x128xf32>
    %cst = arith.constant dense<0.000000e+00> : vector<16x128xf32>
    %2 = tpu.matmul %0, %1, %cst {dimension_numbers = #tpu.dot_dimension_numbers<[1], [0], [0], [1], [0, 0, 1, 1], [], []>} : vector<16x128xf32>, vector<128x128xf32>, vector<16x128xf32> -> vector<16x128xf32>
    %c0_3 = arith.constant 0 : index
    %c0_4 = arith.constant 0 : index
    %3 = vector.load %arg4[%c0_3, %c0_4] : memref<1x128xf32, #tpu.memory_space<vmem>>, vector<1x128xf32>
    %4 = vector.broadcast %3 : vector<1x128xf32> to vector<16x128xf32>
    %5 = arith.addf %2, %4 : vector<16x128xf32>
    %cst_5 = arith.constant 5.000000e-01 : f32
    %6 = vector.broadcast %cst_5 : f32 to vector<16x128xf32>
    %7 = arith.mulf %6, %5 : vector<16x128xf32>
    %cst_6 = arith.constant 0.707106769 : f32
    %8 = vector.broadcast %cst_6 : f32 to vector<16x128xf32>
    %9 = arith.mulf %5, %8 : vector<16x128xf32>
    %10 = math.erf %9 : vector<16x128xf32>
    %cst_7 = arith.constant 1.000000e+00 : f32
    %11 = vector.broadcast %cst_7 : f32 to vector<16x128xf32>
    %12 = arith.addf %11, %10 : vector<16x128xf32>
    %13 = arith.mulf %7, %12 : vector<16x128xf32>
    %c0_8 = arith.constant 0 : index
    %c0_9 = arith.constant 0 : index
    %14 = vector.load %arg5[%c0_8, %c0_9] : memref<128x128xf32, #tpu.memory_space<vmem>>, vector<128x128xf32>
    %cst_10 = arith.constant dense<0.000000e+00> : vector<16x128xf32>
    %15 = tpu.matmul %13, %14, %cst_10 {dimension_numbers = #tpu.dot_dimension_numbers<[1], [0], [0], [1], [0, 0, 1, 1], [], []>} : vector<16x128xf32>, vector<128x128xf32>, vector<16x128xf32> -> vector<16x128xf32>
    %c0_i32 = arith.constant 0 : i32
    %16 = arith.cmpi eq, %arg1, %c0_i32 : i32
    %17 = arith.extui %16 : i1 to i32
    %c0_i32_11 = arith.constant 0 : i32
    %18 = arith.cmpi ne, %17, %c0_i32_11 : i32
    scf.if %18 {
      %c0_14 = arith.constant 0 : index
      %c0_15 = arith.constant 0 : index
      %22 = vector.load %arg6[%c0_14, %c0_15] : memref<1x128xf32, #tpu.memory_space<vmem>>, vector<1x128xf32>
      %23 = vector.broadcast %22 : vector<1x128xf32> to vector<16x128xf32>
      %24 = arith.addf %15, %23 : vector<16x128xf32>
      %c0_16 = arith.constant 0 : index
      %c0_17 = arith.constant 0 : index
      %25 = vector.load %arg7[%c0_16, %c0_17] : memref<16x128xf32, #tpu.memory_space<vmem>>, vector<16x128xf32>
      tpu.vector_store %arg7[%c0_16, %c0_17], %24 {strides = array<i32>} : memref<16x128xf32, #tpu.memory_space<vmem>>, vector<16x128xf32>,
    } else {
    }
    %c0_i32_12 = arith.constant 0 : i32
    %19 = arith.cmpi sgt, %arg1, %c0_i32_12 : i32
    %20 = arith.extui %19 : i1 to i32
    %c0_i32_13 = arith.constant 0 : i32
    %21 = arith.cmpi ne, %20, %c0_i32_13 : i32
    scf.if %21 {
      %c0_14 = arith.constant 0 : index
      %c0_15 = arith.constant 0 : index
      %22 = vector.load %arg7[%c0_14, %c0_15] : memref<16x128xf32, #tpu.memory_space<vmem>>, vector<16x128xf32>
      %23 = arith.addf %22, %15 : vector<16x128xf32>
      %c0_16 = arith.constant 0 : index
      %c0_17 = arith.constant 0 : index
      %24 = vector.load %arg7[%c0_16, %c0_17] : memref<16x128xf32, #tpu.memory_space<vmem>>, vector<16x128xf32>
      tpu.vector_store %arg7[%c0_16, %c0_17], %23 {strides = array<i32>} : memref<16x128xf32, #tpu.memory_space<vmem>>, vector<16x128xf32>,
    } else {
    }
    return
  }
  func.func @transform_0(%arg0: i32, %arg1: i32) -> (i32, i32) {
    %c0_i32 = arith.constant 0 : i32
    %c0_i32_0 = arith.constant 0 : i32
    return %arg0, %c0_i32 : i32, i32
  }
  func.func @transform_1(%arg0: i32, %arg1: i32) -> (i32, i32) {
    %c0_i32 = arith.constant 0 : i32
    %c0_i32_0 = arith.constant 0 : i32
    return %c0_i32, %arg1 : i32, i32
  }
  func.func @transform_2(%arg0: i32, %arg1: i32) -> (i32, i32) {
    %c0_i32 = arith.constant 0 : i32
    %c0_i32_0 = arith.constant 0 : i32
    return %c0_i32, %arg1 : i32, i32
  }
  func.func @transform_3(%arg0: i32, %arg1: i32) -> (i32, i32) {
    %c0_i32 = arith.constant 0 : i32
    %c0_i32_0 = arith.constant 0 : i32
    return %arg1, %c0_i32 : i32, i32
  }
  func.func @transform_4(%arg0: i32, %arg1: i32) -> (i32, i32) {
    %c0_i32 = arith.constant 0 : i32
    %c0_i32_0 = arith.constant 0 : i32
    %c0_i32_1 = arith.constant 0 : i32
    return %c0_i32, %c0_i32_0 : i32, i32
  }
  func.func @transform_5(%arg0: i32, %arg1: i32) -> (i32, i32) {
    %c0_i32 = arith.constant 0 : i32
    %c0_i32_0 = arith.constant 0 : i32
    return %arg0, %c0_i32 : i32, i32
  }
}

</mosaic_0001>

<llo_original>
// kernel: tpu_custom_call.1
$region0: #{tpu_custom_call.1}
  #allocation0 [shape = 'u32[]', space=smem, size = 0x4, offset = 0x4, fixed_abs, tag = 'smem constant byte address 0x4 - core index']
  #allocation1 [shape = 'u32[72,128]{1,0:T(1,128)}', space=vmem, size = 0x9000, scoped, tag = 'internal scratch']
  %s0 = inlined_call_operand.hbm [shape: f32[16,128], index: 0, kind: input, shape index: {}]
  %s1 = inlined_call_operand.hbm [shape: f32[128,128], index: 1, kind: input, shape index: {}]
  %s2 = inlined_call_operand.vmem [shape: f32[1,128], index: 2, kind: input, shape index: {}]
  %s3 = inlined_call_operand.hbm [shape: f32[128,128], index: 3, kind: input, shape index: {}]
  %s4 = inlined_call_operand.vmem [shape: f32[1,128], index: 4, kind: input, shape index: {}]
  %s5 = inlined_call_operand.hbm [shape: f32[16,128], index: 5, kind: output, shape index: {}]
  %s6 = sld [smem:[#allocation0]]
  $region50: #{tpu_custom_call.1} parent=0
    _
  %s8 = ssub.s32 1, %s6
  %s9 = scalar_select 0, %s8, %s6
  $region1: #{tpu_custom_call.1} parent=0
    #allocation2 [shape = 'u8[8192]{0}', space=vmem, size = 0x2000, scoped, tag = 'input window, operand 0, single buffered']
    #allocation3 [shape = 's32[1]{0}', space=sflag, size = 0x4, scoped, tag = 'scoped memory for tpu_custom_call.1']
    #allocation4 [shape = 's32[1]{0}', space=sflag, size = 0x4, scoped, tag = 'scoped memory for tpu_custom_call.1']
    #allocation5 [shape = 'u8[65536]{0}', space=vmem, size = 0x10000, scoped, tag = 'input window, operand 1, single buffered']
    #allocation6 [shape = 's32[1]{0}', space=sflag, size = 0x4, scoped, tag = 'scoped memory for tpu_custom_call.1']
    #allocation7 [shape = 'u8[65536]{0}', space=vmem, size = 0x10000, scoped, tag = 'input window, operand 3, single buffered']
    #allocation8 [shape = 'u8[8192]{0}', space=vmem, size = 0x2000, scoped, tag = 'output window, operand 0, single buffered']
    %10 = vsyncpa [#allocation3], 0
    %11 = vsyncpa [#allocation6], 0
    %12 = vsyncpa [#allocation4], 0
    // Predicated region
    $region2: #{tpu_custom_call.1} parent=1 // pred_check
      _
    $region3: #{tpu_custom_call.1} parent=1 // pred_check_branch
      %14 = sbr.rel (0) target = $region5
    $region4: #{tpu_custom_call.1} parent=1 // pred_region
      %16 = vsyncadd [#allocation3], 0
      %s17 = sshll.u32 %s0, 4
      %s18 = int_to_ptr.hbm [resolvable:$true] %s17
      %s19 = sshll.u32 [#allocation2], 4
      %s20 = int_to_ptr.vmem [resolvable:$true] %s19
      %25 = dma.hbm_to_vmem [thread:$0]  %s18, 256, %s20, [#allocation3], 128, 128, 8
    $region5: #{tpu_custom_call.1} parent=1 // pred_fallthru
      _
    // Predicated region
    $region6: #{tpu_custom_call.1} parent=1 // pred_check
      _
    $region7: #{tpu_custom_call.1} parent=1 // pred_check_branch
      %27 = sbr.rel (0) target = $region9
    $region8: #{tpu_custom_call.1} parent=1 // pred_region
      %29 = vsyncadd [#allocation6], 0
      %s30 = sshll.u32 %s1, 4
      %s31 = int_to_ptr.hbm [resolvable:$true] %s30
      %s32 = sshll.u32 [#allocation5], 4
      %s33 = int_to_ptr.vmem [resolvable:$true] %s32
      %38 = dma.hbm_to_vmem [thread:$0]  %s31, 2048, %s33, [#allocation6], 128, 128, 8
    $region9: #{tpu_custom_call.1} parent=1 // pred_fallthru
      _
    // Predicated region
    $region10: #{tpu_custom_call.1} parent=1 // pred_check
      _
    $region11: #{tpu_custom_call.1} parent=1 // pred_check_branch
      %40 = sbr.rel (0) target = $region13
    $region12: #{tpu_custom_call.1} parent=1 // pred_region
      _
    $region13: #{tpu_custom_call.1} parent=1 // pred_fallthru
      _
    // Predicated region
    $region14: #{tpu_custom_call.1} parent=1 // pred_check
      _
    $region15: #{tpu_custom_call.1} parent=1 // pred_check_branch
      %42 = sbr.rel (0) target = $region17
    $region16: #{tpu_custom_call.1} parent=1 // pred_region
      %44 = vsyncadd [#allocation6], 0
      %s45 = sshll.u32 %s3, 4
      %s46 = int_to_ptr.hbm [resolvable:$true] %s45
      %s47 = sshll.u32 [#allocation7], 4
      %s48 = int_to_ptr.vmem [resolvable:$true] %s47
      %53 = dma.hbm_to_vmem [thread:$0]  %s46, 2048, %s48, [#allocation6], 128, 128, 8
    $region17: #{tpu_custom_call.1} parent=1 // pred_fallthru
      _
    // Predicated region
    $region18: #{tpu_custom_call.1} parent=1 // pred_check
      _
    $region19: #{tpu_custom_call.1} parent=1 // pred_check_branch
      %55 = sbr.rel (0) target = $region21
    $region20: #{tpu_custom_call.1} parent=1 // pred_region
      _
    $region21: #{tpu_custom_call.1} parent=1 // pred_fallthru
      _
    // Predicated region
    $region22: #{tpu_custom_call.1} parent=1 // pred_check
      _
    $region23: #{tpu_custom_call.1} parent=1 // pred_check_branch
      %57 = sbr.rel (0) target = $region25
    $region24: #{tpu_custom_call.1} parent=1 // pred_region
      %59 = dma.done [#allocation3], 256
    $region25: #{tpu_custom_call.1} parent=1 // pred_fallthru
      _
    // Predicated region
    $region26: #{tpu_custom_call.1} parent=1 // pred_check
      _
    $region27: #{tpu_custom_call.1} parent=1 // pred_check_branch
      %61 = sbr.rel (0) target = $region29
    $region28: #{tpu_custom_call.1} parent=1 // pred_region
      %63 = dma.done [#allocation6], 2048
    $region29: #{tpu_custom_call.1} parent=1 // pred_fallthru
      _
    // Predicated region
    $region30: #{tpu_custom_call.1} parent=1 // pred_check
      _
    $region31: #{tpu_custom_call.1} parent=1 // pred_check_branch
      %65 = sbr.rel (0) target = $region33
    $region32: #{tpu_custom_call.1} parent=1 // pred_region
      %67 = dma.done [#allocation6], 2048
    $region33: #{tpu_custom_call.1} parent=1 // pred_fallthru
      _
    %v68 = vld [vmem:[#allocation2] sm:$0xff]
    %v69 = vld [vmem:[#allocation2 + $0x8] sm:$0xff]
    %v70 = vld [vmem:[#allocation5] sm:$0xff]
    %v71 = vld [vmem:[#allocation5 + $0x8] sm:$0xff]
    %v72 = vld [vmem:[#allocation5 + $0x10] sm:$0xff]
    %v73 = vld [vmem:[#allocation5 + $0x18] sm:$0xff]
    %v74 = vld [vmem:[#allocation5 + $0x20] sm:$0xff]
    %v75 = vld [vmem:[#allocation5 + $0x28] sm:$0xff]
    %v76 = vld [vmem:[#allocation5 + $0x30] sm:$0xff]
    %v77 = vld [vmem:[#allocation5 + $0x38] sm:$0xff]
    %v78 = vld [vmem:[#allocation5 + $0x40] sm:$0xff]
    %v79 = vld [vmem:[#allocation5 + $0x48] sm:$0xff]
    %v80 = vld [vmem:[#allocation5 + $0x50] sm:$0xff]
    %v81 = vld [vmem:[#allocation5 + $0x58] sm:$0xff]
    %v82 = vld [vmem:[#allocation5 + $0x60] sm:$0xff]
    %v83 = vld [vmem:[#allocation5 + $0x68] sm:$0xff]
    %v84 = vld [vmem:[#allocation5 + $0x70] sm:$0xff]
    %v85 = vld [vmem:[#allocation5 + $0x78] sm:$0xff]
    %v86 = vld [vmem:[%s2] sm:$0x1]
    %v88 = vperm.slane %v86, 0
    %90 = vmatpush.msra.mxu0 %v85
    %91 = vmatpush.msra.mxu0 %v84
    %92 = vmatpush.msra.mxu0 %v83
    %93 = vmatpush.msra.mxu0 %v82
    %94 = vmatpush.msra.mxu0 %v81
    %95 = vmatpush.msra.mxu0 %v80
    %96 = vmatpush.msra.mxu0 %v79
    %97 = vmatpush.msra.mxu0 %v78
    %98 = vmatpush.msra.mxu0 %v77
    %99 = vmatpush.msra.mxu0 %v76
    %100 = vmatpush.msra.mxu0 %v75
    %101 = vmatpush.msra.mxu0 %v74
    %102 = vmatpush.msra.mxu0 %v73
    %103 = vmatpush.msra.mxu0 %v72
    %104 = vmatpush.msra.mxu0 %v71
    %105 = vmatpush.msra.mxu0 %v70
    %106 = vmatmul.f32.gmra.mxu0 %v68
    %v107 = vpop.f32.mrf.mxu0
    %v108 = vadd.f32 %v88, %v107
    %109 = vmatmul.f32.gmra.mxu0 %v69
    %v110 = vpop.f32.mrf.mxu0
    %v111 = vadd.f32 %v88, %v110
    %112 = vdwg.mxu0
    %v113 = vmul.f32 %v108, 0.5
    %v114 = vmul.f32 %v111, 0.5
    %v115 = vmul.f32 %v108, 0.70710677
    %v116 = vmul.f32 %v111, 0.70710677
    %v117 = vmul.f32 %v115, %v115
    %v118 = vmin.f32 16.0, %v117
    %v119 = vmul.f32 %v118, 2.1237322e-06
    %v120 = vadd.f32 %v119, 0.00028619796
    %v121 = vmul.f32 %v118, %v120
    %v122 = vadd.f32 %v121, 0.0036580483
    %v123 = vmul.f32 %v118, %v122
    %v124 = vadd.f32 %v123, 0.05243302
    %v125 = vmul.f32 %v118, %v124
    %v126 = vadd.f32 %v125, 0.18741608
    %v127 = vmul.f32 %v118, %v126
    %v128 = vadd.f32 %v127, 1.1283791
    %v129 = vmul.f32 %v115, %v128
    %v130 = vmul.f32 %v118, 3.8918573e-05
    %v131 = vadd.f32 %v130, 0.001143296
    %v132 = vmul.f32 %v118, %v131
    %v133 = vadd.f32 %v132, 0.014752088
    %v134 = vmul.f32 %v118, %v133
    %v135 = vadd.f32 %v134, 0.112945676
    %v136 = vmul.f32 %v118, %v135
    %v137 = vadd.f32 %v136, 0.4994258
    %v138 = vmul.f32 %v118, %v137
    %v139 = vadd.f32 %v138, 1.0
    %v140 = vrcp.pop %v139
    %v141 = vmul.f32 %v139, %v140
    %v142 = vsub.f32 1.0, %v141
    %v143 = vmul.f32 %v140, %v142
    %v144 = vadd.f32 %v140, %v143
    %vm145 = vweird.f32 %v139
    %vm146 = vweird.f32 %v140
    %vm147 = vmor %vm145, %vm146
    %v148 = vsel %vm147, %v140, %v144
    %v149 = vand.u32 2147483647, %v139
    %vm150 = vcmp.eq.f32.partialorder %v149, 8.507059e+37
    %v151 = vand.u32 %v139, 2147483648
    %v152 = vor.u32 1.1754944e-38, %v151
    %v153 = vsel %vm150, %v152, %v148
    %v154 = vmul.f32 %v129, %v153
    %v155 = vmin.f32 %v154, 1.0
    %v156 = vmax.f32 %v155, -1.0
    %v157 = vmul.f32 %v116, %v116
    %v158 = vmin.f32 16.0, %v157
    %v159 = vmul.f32 %v158, 2.1237322e-06
    %v160 = vadd.f32 %v159, 0.00028619796
    %v161 = vmul.f32 %v158, %v160
    %v162 = vadd.f32 %v161, 0.0036580483
    %v163 = vmul.f32 %v158, %v162
    %v164 = vadd.f32 %v163, 0.05243302
    %v165 = vmul.f32 %v158, %v164
    %v166 = vadd.f32 %v165, 0.18741608
    %v167 = vmul.f32 %v158, %v166
    %v168 = vadd.f32 %v167, 1.1283791
    %v169 = vmul.f32 %v116, %v168
    %v170 = vmul.f32 %v158, 3.8918573e-05
    %v171 = vadd.f32 %v170, 0.001143296
    %v172 = vmul.f32 %v158, %v171
    %v173 = vadd.f32 %v172, 0.014752088
    %v174 = vmul.f32 %v158, %v173
    %v175 = vadd.f32 %v174, 0.112945676
    %v176 = vmul.f32 %v158, %v175
    %v177 = vadd.f32 %v176, 0.4994258
    %v178 = vmul.f32 %v158, %v177
    %v179 = vadd.f32 %v178, 1.0
    %v180 = vrcp.pop %v179
    %v181 = vmul.f32 %v179, %v180
    %v182 = vsub.f32 1.0, %v181
    %v183 = vmul.f32 %v180, %v182
    %v184 = vadd.f32 %v180, %v183
    %vm185 = vweird.f32 %v179
    %vm186 = vweird.f32 %v180
    %vm187 = vmor %vm185, %vm186
    %v188 = vsel %vm187, %v180, %v184
    %v189 = vand.u32 2147483647, %v179
    %vm190 = vcmp.eq.f32.partialorder %v189, 8.507059e+37
    %v191 = vand.u32 %v179, 2147483648
    %v192 = vor.u32 1.1754944e-38, %v191
    %v193 = vsel %vm190, %v192, %v188
    %v194 = vmul.f32 %v169, %v193
    %v195 = vmin.f32 %v194, 1.0
    %v196 = vmax.f32 %v195, -1.0
    %v197 = vadd.f32 %v156, 1.0
    %v198 = vadd.f32 %v196, 1.0
    %v199 = vmul.f32 %v113, %v197
    %v200 = vmul.f32 %v114, %v198
    %v201 = vld [vmem:[#allocation7] sm:$0xff]
    %v202 = vld [vmem:[#allocation7 + $0x8] sm:$0xff]
    %v203 = vld [vmem:[#allocation7 + $0x10] sm:$0xff]
    %v204 = vld [vmem:[#allocation7 + $0x18] sm:$0xff]
    %v205 = vld [vmem:[#allocation7 + $0x20] sm:$0xff]
    %v206 = vld [vmem:[#allocation7 + $0x28] sm:$0xff]
    %v207 = vld [vmem:[#allocation7 + $0x30] sm:$0xff]
    %v208 = vld [vmem:[#allocation7 + $0x38] sm:$0xff]
    %v209 = vld [vmem:[#allocation7 + $0x40] sm:$0xff]
    %v210 = vld [vmem:[#allocation7 + $0x48] sm:$0xff]
    %v211 = vld [vmem:[#allocation7 + $0x50] sm:$0xff]
    %v212 = vld [vmem:[#allocation7 + $0x58] sm:$0xff]
    %v213 = vld [vmem:[#allocation7 + $0x60] sm:$0xff]
    %v214 = vld [vmem:[#allocation7 + $0x68] sm:$0xff]
    %v215 = vld [vmem:[#allocation7 + $0x70] sm:$0xff]
    %v216 = vld [vmem:[#allocation7 + $0x78] sm:$0xff]
    %217 = vmatpush.msra.mxu0 %v216
    %218 = vmatpush.msra.mxu0 %v215
    %219 = vmatpush.msra.mxu0 %v214
    %220 = vmatpush.msra.mxu0 %v213
    %221 = vmatpush.msra.mxu0 %v212
    %222 = vmatpush.msra.mxu0 %v211
    %223 = vmatpush.msra.mxu0 %v210
    %224 = vmatpush.msra.mxu0 %v209
    %225 = vmatpush.msra.mxu0 %v208
    %226 = vmatpush.msra.mxu0 %v207
    %227 = vmatpush.msra.mxu0 %v206
    %228 = vmatpush.msra.mxu0 %v205
    %229 = vmatpush.msra.mxu0 %v204
    %230 = vmatpush.msra.mxu0 %v203
    %231 = vmatpush.msra.mxu0 %v202
    %232 = vmatpush.msra.mxu0 %v201
    %233 = vmatmul.f32.gmra.mxu0 %v199
    %v234 = vpop.f32.mrf.mxu0
    %v235 = vadd.f32 0.0, %v234
    %236 = vmatmul.f32.gmra.mxu0 %v200
    %v237 = vpop.f32.mrf.mxu0
    %v238 = vadd.f32 0.0, %v237
    %239 = vdwg.mxu0
    %p240 = scmp.eq.s32.totalorder 0, 0
    // Predicated region
    $region34: #{tpu_custom_call.1} parent=1 // pred_check
      %p241 = pneg %p240
    $region35: #{tpu_custom_call.1} parent=1 // pred_check_branch
      %243 = sbr.rel (%p241) target = $region37
    $region36: #{tpu_custom_call.1} parent=1 // pred_region
      %v244 = vld [vmem:[%s4] sm:$0x1]
      %v246 = vperm.slane %v244, 0
      %v248 = vadd.f32 %v235, %v246
      %v249 = vadd.f32 %v238, %v246
      %250 = vst [vmem:[#allocation8] sm:$0xff] %v248
      %251 = vst [vmem:[#allocation8 + $0x8] sm:$0xff] %v249
    $region37: #{tpu_custom_call.1} parent=1 // pred_fallthru
      _
    %p252 = scmp.gt.s32.totalorder 0, 0
    // Predicated region
    $region38: #{tpu_custom_call.1} parent=1 // pred_check
      %p253 = pneg %p252
    $region39: #{tpu_custom_call.1} parent=1 // pred_check_branch
      %255 = sbr.rel (%p253) target = $region41
    $region40: #{tpu_custom_call.1} parent=1 // pred_region
      %v256 = vld [vmem:[#allocation8] sm:$0xff]
      %v257 = vld [vmem:[#allocation8 + $0x8] sm:$0xff]
      %v258 = vadd.f32 %v256, %v235
      %v259 = vadd.f32 %v257, %v238
      %260 = vst [vmem:[#allocation8] sm:$0xff] %v258
      %261 = vst [vmem:[#allocation8 + $0x8] sm:$0xff] %v259
    $region41: #{tpu_custom_call.1} parent=1 // pred_fallthru
      _
    // Predicated region
    $region42: #{tpu_custom_call.1} parent=1 // pred_check
      _
    $region43: #{tpu_custom_call.1} parent=1 // pred_check_branch
      %263 = sbr.rel (0) target = $region45
    $region44: #{tpu_custom_call.1} parent=1 // pred_region
      %265 = vsyncadd [#allocation4], 0
      %s266 = sshll.u32 [#allocation8], 4
      %s267 = int_to_ptr.vmem [resolvable:$true] %s266
      %s268 = sshll.u32 %s5, 4
      %s269 = int_to_ptr.hbm [resolvable:$true] %s268
      %274 = dma.vmem_to_hbm [thread:$0]  %s267, 256, %s269, [#allocation4], 128, 128, 8
    $region45: #{tpu_custom_call.1} parent=1 // pred_fallthru
      _
    // Predicated region
    $region46: #{tpu_custom_call.1} parent=1 // pred_check
      _
    $region47: #{tpu_custom_call.1} parent=1 // pred_check_branch
      %276 = sbr.rel (0) target = $region49
    $region48: #{tpu_custom_call.1} parent=1 // pred_region
      %278 = dma.done [#allocation4], 256
    $region49: #{tpu_custom_call.1} parent=1 // pred_fallthru
      _
    %279 = vsyncpa [#allocation3], 1
    %280 = vsyncpa [#allocation6], 1
    %281 = vsyncpa [#allocation4], 1

</llo_original>
